<compile_context>
chip_gen: v7x
topology: tpu7x:2x2x1
jax: 0.10.0
libtpu: 0.0.40
codegen_flags: <defaults>
</compile_context>

<pallas_src>
import jax
import jax.numpy as jnp
from jax import lax
from jax.experimental import pallas as pl
from jax.experimental.pallas import tpu as pltpu


_LANE = 128


def _round_up(x, m):
    return ((x + m - 1) // m) * m


def _make_aspp_pooling_kernel(hw, t_hw):
    """Kernel body specialized on the static spatial extent / tile width."""
    rem = hw % t_hw  # valid width of the ragged tail tile (0 == HW divides evenly)

    def kernel(x_ref, w_ref, bias_ref, o_ref, acc_ref):
        # x_ref:    (TN, C_in, t_hw)  current input tile
        # w_ref:    (C_in, C_out)     folded weight  = conv_w.T * bn_scale / HW
        # bias_ref: (1, C_out)        folded BN bias = beta - running_mean * bn_scale
        # o_ref:    (TN, 1, C_out)    relu(bn(conv(avgpool(x)))) for this batch block
        # acc_ref:  (TN, C_in, t_hw)  f32 lane-wide running accumulator (VMEM scratch)
        k = pl.program_id(1)
        last = pl.num_programs(1) - 1

        @pl.when(k == 0)
        def _():
            acc_ref[...] = jnp.zeros_like(acc_ref)

        x = x_ref[...].astype(jnp.float32)

        # Hot loop: pure element-wise VPU adds (no per-tile XLU reduce / relayout),
        # which stay hidden under the tile DMA on all generations.
        if rem != 0:
            @pl.when(k != last)
            def _():
                acc_ref[...] += x

            @pl.when(k == last)
            def _():
                # Only the ragged tail tile is masked (its out-of-bounds lanes hold
                # unspecified data, which would otherwise corrupt the spatial sum).
                idx = lax.broadcasted_iota(jnp.int32, x.shape, x.ndim - 1)
                acc_ref[...] += jnp.where(idx < rem, x, 0.0)
        else:
            acc_ref[...] += x

        @pl.when(k == last)
        def _():
            # Single cross-lane reduce + tiny MXU matmul, once per batch block.
            pooled = jnp.sum(acc_ref[...], axis=-1)                    # (TN, C_in)
            y = jnp.dot(pooled, w_ref[...],
                        preferred_element_type=jnp.float32)            # (TN, C_out)
            y = jnp.maximum(y + bias_ref[...], 0.0)                    # folded BN bias + ReLU
            o_ref[...] = y.reshape(o_ref.shape).astype(o_ref.dtype)

    return kernel


def aspp_pooling_forward(x, conv_w, gamma, beta, running_mean, running_var,
                         eps=1e-5, hw_tile=2048, n_tile=8,
                         vmem_budget_bytes=20 * 1024 * 1024):
    """x: (N, C_in, H, W) NCHW. conv_w: (C_out, C_in, 1, 1). Returns (N, C_out, H, W)."""
    N, C_in, H, W = x.shape
    C_out = conv_w.shape[0]
    HW = H * W
    itemsize = jnp.dtype(x.dtype).itemsize

    # Fold BN (inference, running stats) scale and the 1/HW mean factor into the
    # pre-transposed 1x1-conv weight; keep the folded bias separate.
    scale = (gamma.astype(jnp.float32)
             / jnp.sqrt(running_var.astype(jnp.float32) + eps))
    w_folded = (conv_w.reshape(C_out, C_in).astype(jnp.float32).T
                * scale[None, :]) / float(HW)                           # (C_in, C_out)
    bias = (beta.astype(jnp.float32)
            - running_mean.astype(jnp.float32) * scale).reshape(1, C_out)

    # --- tile sizing ---------------------------------------------------------
    # Lane-dense HW tiles (multiple of 128); NO XLA-side padding of x -- the
    # ragged tail tile is masked inside the kernel instead.
    t_hw = max(_LANE, (hw_tile // _LANE) * _LANE)     # clamp caller value to 128-multiple
    t_hw = min(t_hw, _round_up(HW, _LANE))
    tn = max(1, min(n_tile, N))

    def vmem_estimate(tn_, thw_):
        return (2 * tn_ * C_in * thw_ * itemsize      # double-buffered x tile
                + tn_ * C_in * thw_ * 4               # lane-wide f32 accumulator
                + 2 * (C_in * C_out + C_out) * 4      # (double-buffered) weight + bias
                + 2 * tn_ * C_out * 4)                # output block

    while vmem_estimate(tn, t_hw) > vmem_budget_bytes and t_hw > _LANE:
        t_hw = max(_LANE, ((t_hw // 2) // _LANE) * _LANE)
    while vmem_estimate(tn, t_hw) > vmem_budget_bytes and tn > 1:
        tn -= 1

    num_n = pl.cdiv(N, tn)
    num_k = pl.cdiv(HW, t_hw)

    x_flat = x.reshape(N, C_in, HW)   # pure reshape; no extra HBM traffic

    cost = pl.CostEstimate(
        flops=N * C_in * HW + 2 * N * C_in * C_out + 2 * N * C_out,
        transcendentals=0,
        bytes_accessed=(x_flat.size * itemsize + w_folded.size * 4
                        + bias.size * 4 + N * C_out * 4))

    kernel = _make_aspp_pooling_kernel(HW, t_hw)

    pooled = pl.pallas_call(
        kernel,
        out_shape=jax.ShapeDtypeStruct((N, 1, C_out), jnp.float32),
        grid_spec=pltpu.PrefetchScalarGridSpec(
            num_scalar_prefetch=0,
            grid=(num_n, num_k),                     # HW-reduction axis last ("arbitrary")
            in_specs=[
                pl.BlockSpec((tn, C_in, t_hw), lambda n, k: (n, 0, k)),
                # NOTE: constant-index weight/bias keep default 2-deep buffering here
                # for portability; on v7x, pipeline_mode=pl.Buffered(1) would reclaim
                # that VMEM for a larger t_hw.
                pl.BlockSpec((C_in, C_out), lambda n, k: (0, 0)),
                pl.BlockSpec((1, C_out), lambda n, k: (0, 0)),
            ],
            out_specs=pl.BlockSpec((tn, 1, C_out), lambda n, k: (n, 0, 0)),
            scratch_shapes=[pltpu.VMEM((tn, C_in, t_hw), jnp.float32)],
        ),
        compiler_params=pltpu.CompilerParams(
            dimension_semantics=("parallel", "arbitrary"),
            vmem_limit_bytes=int(min(max(2 * vmem_estimate(tn, t_hw), 32 << 20),
                                     64 << 20))),
        cost_estimate=cost,
    )(x_flat, w_folded, bias)

    # TODO(synk): for N=1 inference on v7x (2 TensorCores) split the HW reduction
    # across cores (core_map with per-core partial sums) so the second core isn't idle.

    # Bilinear upsample of a 1x1 map == spatial broadcast; left to XLA so it fuses
    # into downstream consumers instead of HW x redundant HBM writes in-kernel.
    y = pooled.reshape(N, C_out)
    return jnp.broadcast_to(y[:, :, None, None], (N, C_out, H, W)).astype(x.dtype)


def _reference(x, conv_w, gamma, beta, running_mean, running_var, eps=1e-5):
    # Pure-JAX reference of the same inference semantics.
    N, C_in, H, W = x.shape
    C_out = conv_w.shape[0]
    pooled = jnp.mean(x.astype(jnp.float32), axis=(2, 3))           # (N, C_in)
    y = pooled @ conv_w.reshape(C_out, C_in).astype(jnp.float32).T  # (N, C_out)
    y = (y - running_mean) / jnp.sqrt(running_var + eps) * gamma + beta
    y = jnp.maximum(y, 0.0)
    return jnp.broadcast_to(y[:, :, None, None], (N, C_out, H, W))


def _run_case(key, N, C_in, C_out, H, W, **kw):
    k_x, k_w, k_g, k_b, k_m, k_v = jax.random.split(key, 6)
    x = jax.random.normal(k_x, (N, C_in, H, W), dtype=jnp.float32)
    conv_w = jax.random.normal(k_w, (C_out, C_in, 1, 1), dtype=jnp.float32) * 0.1
    gamma = 1.0 + 0.1 * jax.random.normal(k_g, (C_out,), dtype=jnp.float32)
    beta = 0.1 * jax.random.normal(k_b, (C_out,), dtype=jnp.float32)
    running_mean = 0.05 * jax.random.normal(k_m, (C_out,), dtype=jnp.float32)
    running_var = jnp.abs(1.0 + 0.1 * jax.random.normal(k_v, (C_out,), dtype=jnp.float32))

    out = aspp_pooling_forward(x, conv_w, gamma, beta, running_mean, running_var, **kw)
    out = jax.block_until_ready(out)
    ref = _reference(x, conv_w, gamma, beta, running_mean, running_var)
    assert out.shape == (N, C_out, H, W)
    assert jnp.allclose(out, ref, atol=1e-5, rtol=1e-5), "mismatch vs reference"


if __name__ == "__main__":
    key = jax.random.PRNGKey(0)
    k0, k1, k2 = jax.random.split(key, 3)

    # Primary case: N=2, C_in=4, C_out=8, H=W=16 (HW divides the tile evenly).
    _run_case(k0, N=2, C_in=4, C_out=8, H=16, W=16)
    # Ragged tail tile (HW=81 < 128) + odd channel counts exercise the in-kernel mask.
    _run_case(k1, N=3, C_in=6, C_out=5, H=9, W=9)
    # Multi-tile reduction with a ragged tail (HW=400, t_hw=128 -> 4 tiles, rem=16).
    _run_case(k2, N=2, C_in=4, C_out=8, H=20, W=20, hw_tile=128)

    print("KERNEL_OK")
</pallas_src>

<mosaic_0001>
module attributes {stable_mosaic.version = 11 : i64} {
  func.func @kernel(%arg0: i32, %arg1: i32, %arg2: memref<2x4x256xf32, #tpu.memory_space<vmem>>, %arg3: memref<4x8xf32, #tpu.memory_space<vmem>>, %arg4: memref<1x8xf32, #tpu.memory_space<vmem>>, %arg5: memref<2x1x8xf32, #tpu.memory_space<vmem>>, %arg6: memref<2x4x256xf32, #tpu.memory_space<vmem>>) attributes {dimension_semantics = [#tpu.dimension_semantics<parallel>, #tpu.dimension_semantics<arbitrary>], iteration_bounds = array<i64: 1, 1>, scalar_prefetch = 0 : i64, scratch_operands = 1 : i64, tpu.core_type = #tpu.core_type<tc>, window_params = [{transform_indices = @transform_0, window_bounds = array<i64: 2, 4, 256>}, {pipeline_mode = #tpu.pipeline_mode<synchronous>, transform_indices = @transform_1, window_bounds = array<i64: 4, 8>}, {pipeline_mode = #tpu.pipeline_mode<synchronous>, transform_indices = @transform_2, window_bounds = array<i64: 1, 8>}, {transform_indices = @transform_3, window_bounds = array<i64: 2, 1, 8>}]} {
    %c0_i32 = arith.constant 0 : i32
    %0 = arith.cmpi eq, %arg1, %c0_i32 : i32
    %1 = arith.extui %0 : i1 to i32
    %c0_i32_0 = arith.constant 0 : i32
    %2 = arith.cmpi ne, %1, %c0_i32_0 : i32
    scf.if %2 {
      %cst = arith.constant 0.000000e+00 : f32
      %10 = vector.broadcast %cst : f32 to vector<2x4x256xf32>
      %c0_11 = arith.constant 0 : index
      %c0_12 = arith.constant 0 : index
      %c0_13 = arith.constant 0 : index
      %11 = vector.load %arg6[%c0_11, %c0_12, %c0_13] : memref<2x4x256xf32, #tpu.memory_space<vmem>>, vector<2x4x256xf32>
      tpu.vector_store %arg6[%c0_11, %c0_12, %c0_13], %10 {strides = array<i32>} : memref<2x4x256xf32, #tpu.memory_space<vmem>>, vector<2x4x256xf32>,
    } else {
    }
    %c0 = arith.constant 0 : index
    %c0_1 = arith.constant 0 : index
    %c0_2 = arith.constant 0 : index
    %3 = vector.load %arg2[%c0, %c0_1, %c0_2] : memref<2x4x256xf32, #tpu.memory_space<vmem>>, vector<2x4x256xf32>
    %c0_3 = arith.constant 0 : index
    %c0_4 = arith.constant 0 : index
    %c0_5 = arith.constant 0 : index
    %4 = vector.load %arg6[%c0_3, %c0_4, %c0_5] : memref<2x4x256xf32, #tpu.memory_space<vmem>>, vector<2x4x256xf32>
    %5 = arith.addf %4, %3 : vector<2x4x256xf32>
    %c0_6 = arith.constant 0 : index
    %c0_7 = arith.constant 0 : index
    %c0_8 = arith.constant 0 : index
    %6 = vector.load %arg6[%c0_6, %c0_7, %c0_8] : memref<2x4x256xf32, #tpu.memory_space<vmem>>, vector<2x4x256xf32>
    tpu.vector_store %arg6[%c0_6, %c0_7, %c0_8], %5 {strides = array<i32>} : memref<2x4x256xf32, #tpu.memory_space<vmem>>, vector<2x4x256xf32>,
    %c0_i32_9 = arith.constant 0 : i32
    %7 = arith.cmpi eq, %arg1, %c0_i32_9 : i32
    %8 = arith.extui %7 : i1 to i32
    %c0_i32_10 = arith.constant 0 : i32
    %9 = arith.cmpi ne, %8, %c0_i32_10 : i32
    scf.if %9 {
      %c0_11 = arith.constant 0 : index
      %c0_12 = arith.constant 0 : index
      %c0_13 = arith.constant 0 : index
      %10 = vector.load %arg6[%c0_11, %c0_12, %c0_13] : memref<2x4x256xf32, #tpu.memory_space<vmem>>, vector<2x4x256xf32>
      %cst = arith.constant dense<0.000000e+00> : vector<2x4xf32>
      %11 = vector.multi_reduction <add>, %10, %cst [2] : vector<2x4x256xf32> to vector<2x4xf32>
      %c0_14 = arith.constant 0 : index
      %c0_15 = arith.constant 0 : index
      %12 = vector.load %arg3[%c0_14, %c0_15] : memref<4x8xf32, #tpu.memory_space<vmem>>, vector<4x8xf32>
      %cst_16 = arith.constant dense<0.000000e+00> : vector<2x8xf32>
      %13 = tpu.matmul %11, %12, %cst_16 {dimension_numbers = #tpu.dot_dimension_numbers<[1], [0], [0], [1], [0, 0, 1, 1], [], []>} : vector<2x4xf32>, vector<4x8xf32>, vector<2x8xf32> -> vector<2x8xf32>
      %c0_17 = arith.constant 0 : index
      %c0_18 = arith.constant 0 : index
      %14 = vector.load %arg4[%c0_17, %c0_18] : memref<1x8xf32, #tpu.memory_space<vmem>>, vector<1x8xf32>
      %15 = vector.broadcast %14 : vector<1x8xf32> to vector<2x8xf32>
      %16 = arith.addf %13, %15 : vector<2x8xf32>
      %cst_19 = arith.constant 0.000000e+00 : f32
      %17 = vector.broadcast %cst_19 : f32 to vector<2x8xf32>
      %18 = arith.maximumf %16, %17 : vector<2x8xf32>
      %19 = vector.shape_cast %18 : vector<2x8xf32> to vector<2x1x8xf32>
      %c0_20 = arith.constant 0 : index
      %c0_21 = arith.constant 0 : index
      %c0_22 = arith.constant 0 : index
      %20 = vector.load %arg5[%c0_20, %c0_21, %c0_22] : memref<2x1x8xf32, #tpu.memory_space<vmem>>, vector<2x1x8xf32>
      tpu.vector_store %arg5[%c0_20, %c0_21, %c0_22], %19 {strides = array<i32>} : memref<2x1x8xf32, #tpu.memory_space<vmem>>, vector<2x1x8xf32>,
    } else {
    }
    return
  }
  func.func @transform_0(%arg0: i32, %arg1: i32) -> (i32, i32, i32) {
    %c0_i32 = arith.constant 0 : i32
    %c0_i32_0 = arith.constant 0 : i32
    return %arg0, %c0_i32, %arg1 : i32, i32, i32
  }
  func.func @transform_1(%arg0: i32, %arg1: i32) -> (i32, i32) {
    %c0_i32 = arith.constant 0 : i32
    %c0_i32_0 = arith.constant 0 : i32
    %c0_i32_1 = arith.constant 0 : i32
    return %c0_i32, %c0_i32_0 : i32, i32
  }
  func.func @transform_2(%arg0: i32, %arg1: i32) -> (i32, i32) {
    %c0_i32 = arith.constant 0 : i32
    %c0_i32_0 = arith.constant 0 : i32
    %c0_i32_1 = arith.constant 0 : i32
    return %c0_i32, %c0_i32_0 : i32, i32
  }
  func.func @transform_3(%arg0: i32, %arg1: i32) -> (i32, i32, i32) {
    %c0_i32 = arith.constant 0 : i32
    %c0_i32_0 = arith.constant 0 : i32
    %c0_i32_1 = arith.constant 0 : i32
    return %arg0, %c0_i32, %c0_i32_0 : i32, i32, i32
  }
}

</mosaic_0001>

<llo_original>
// kernel: tpu_custom_call.1
$region0: #{tpu_custom_call.1}
  #allocation0 [shape = 'u32[]', space=smem, size = 0x4, offset = 0x4, fixed_abs, tag = 'smem constant byte address 0x4 - core index']
  #allocation1 [shape = 'u32[144,128]{1,0:T(1,128)}', space=vmem, size = 0x12000, scoped, tag = 'internal scratch']
  #allocation2 [shape = 'f32[2,4,256]{2,1,0:T(4,128)}', space=vmem, size = 0x2000, scoped, tag = 'scratch operand']
  %s0 = inlined_call_operand.hbm [shape: f32[2,4,256], index: 0, kind: input, shape index: {}]
  %s1 = inlined_call_operand.hbm [shape: f32[4,8], index: 1, kind: input, shape index: {}]
  %s2 = inlined_call_operand.vmem [shape: f32[1,8], index: 2, kind: input, shape index: {}]
  %s3 = inlined_call_operand.hbm [shape: f32[2,1,8], index: 3, kind: output, shape index: {}]
  %s4 = sld [smem:[#allocation0]]
  $region38: #{tpu_custom_call.1} parent=0
    _
  %s6 = ssub.s32 1, %s4
  %s7 = scalar_select 0, %s6, %s4
  $region1: #{tpu_custom_call.1} parent=0
    #allocation3 [shape = 'u8[8192]{0}', space=vmem, size = 0x2000, scoped, tag = 'input window, operand 0, single buffered']
    #allocation4 [shape = 's32[1]{0}', space=sflag, size = 0x4, scoped, tag = 'scoped memory for tpu_custom_call.1']
    #allocation5 [shape = 's32[1]{0}', space=sflag, size = 0x4, scoped, tag = 'scoped memory for tpu_custom_call.1']
    #allocation6 [shape = 'u8[2048]{0}', space=vmem, size = 0x800, scoped, tag = 'input window, operand 1, single buffered']
    #allocation7 [shape = 's32[1]{0}', space=sflag, size = 0x4, scoped, tag = 'scoped memory for tpu_custom_call.1']
    #allocation8 [shape = 'u8[1024]{0}', space=vmem, size = 0x400, scoped, tag = 'output window, operand 0, single buffered']
    %8 = vsyncpa [#allocation4], 0
    %9 = vsyncpa [#allocation7], 0
    %10 = vsyncpa [#allocation5], 0
    // Predicated region
    $region2: #{tpu_custom_call.1} parent=1 // pred_check
      _
    $region3: #{tpu_custom_call.1} parent=1 // pred_check_branch
      %12 = sbr.rel (0) target = $region5
    $region4: #{tpu_custom_call.1} parent=1 // pred_region
      %s14 = ssub.s32 256, 256
      %15 = vsyncadd [#allocation4], %s14
      %s16 = sshll.u32 [#allocation3], 4
      %s17 = int_to_ptr.vmem [resolvable:$true] %s16
      %22 = dma.hbm_to_vmem [thread:$0]  %s0, 256, %s17, [#allocation4], 128, 128, 8
    $region5: #{tpu_custom_call.1} parent=1 // pred_fallthru
      _
    // Predicated region
    $region6: #{tpu_custom_call.1} parent=1 // pred_check
      _
    $region7: #{tpu_custom_call.1} parent=1 // pred_check_branch
      %24 = sbr.rel (0) target = $region9
    $region8: #{tpu_custom_call.1} parent=1 // pred_region
      %s26 = ssub.s32 64, 64
      %27 = vsyncadd [#allocation7], %s26
      %s29 = sshll.u32 [#allocation6], 4
      %s30 = int_to_ptr.vmem [resolvable:$true] %s29
      %32 = dma.hbm_to_vmem [thread:$0]  %s1, 64, %s30, [#allocation7]
    $region9: #{tpu_custom_call.1} parent=1 // pred_fallthru
      _
    // Predicated region
    $region10: #{tpu_custom_call.1} parent=1 // pred_check
      _
    $region11: #{tpu_custom_call.1} parent=1 // pred_check_branch
      %34 = sbr.rel (0) target = $region13
    $region12: #{tpu_custom_call.1} parent=1 // pred_region
      _
    $region13: #{tpu_custom_call.1} parent=1 // pred_fallthru
      _
    // Predicated region
    $region14: #{tpu_custom_call.1} parent=1 // pred_check
      _
    $region15: #{tpu_custom_call.1} parent=1 // pred_check_branch
      %36 = sbr.rel (0) target = $region17
    $region16: #{tpu_custom_call.1} parent=1 // pred_region
      %37 = dma.done [#allocation4], 256
    $region17: #{tpu_custom_call.1} parent=1 // pred_fallthru
      _
    // Predicated region
    $region18: #{tpu_custom_call.1} parent=1 // pred_check
      _
    $region19: #{tpu_custom_call.1} parent=1 // pred_check_branch
      %39 = sbr.rel (0) target = $region21
    $region20: #{tpu_custom_call.1} parent=1 // pred_region
      %40 = dma.done [#allocation7], 64
    $region21: #{tpu_custom_call.1} parent=1 // pred_fallthru
      _
    %p41 = scmp.eq.s32.totalorder 0, 0
    // Predicated region
    $region22: #{tpu_custom_call.1} parent=1 // pred_check
      %p42 = pneg %p41
    $region23: #{tpu_custom_call.1} parent=1 // pred_check_branch
      %44 = sbr.rel (%p42) target = $region25
    $region24: #{tpu_custom_call.1} parent=1 // pred_region
      %45 = vst [vmem:[#allocation2] sm:$0xff] 0.0
      %46 = vst [vmem:[#allocation2 + $0x8] sm:$0xff] 0.0
    $region25: #{tpu_custom_call.1} parent=1 // pred_fallthru
      _
    %v47 = vld [vmem:[#allocation3] sm:$0xff]
    %v48 = vld [vmem:[#allocation3 + $0x8] sm:$0xff]
    %v49 = vld [vmem:[#allocation2] sm:$0xff]
    %v50 = vld [vmem:[#allocation2 + $0x8] sm:$0xff]
    %v51 = vadd.f32 %v49, %v47
    %v52 = vadd.f32 %v50, %v48
    %53 = vst [vmem:[#allocation2] sm:$0xff] %v51
    %54 = vst [vmem:[#allocation2 + $0x8] sm:$0xff] %v52
    // Predicated region
    $region26: #{tpu_custom_call.1} parent=1 // pred_check
      %p55 = pneg %p41
    $region27: #{tpu_custom_call.1} parent=1 // pred_check_branch
      %57 = sbr.rel (%p55) target = $region29
    $region28: #{tpu_custom_call.1} parent=1 // pred_region
      %v58 = vld [vmem:[#allocation2] sm:$0xff]
      %v59 = vld [vmem:[#allocation2 + $0x8] sm:$0xff]
      %v62 = vcombine.high %v58, %v58
      %v63 = vcombine.high %v59, %v59
      %vm66 = vcmask 1043456
      %v67 = vsel %vm66, %v58, 0.0
      %v68 = vsel %vm66, %v62, 0.0
      %v69 = vadd.f32 %v67, %v68
      %70 = vadd.xlane.f32.xlu0 %v69
      %v71 = vpop.xlane.xlu0 %70
      %v72 = vsel %vm66, %v59, 0.0
      %v73 = vsel %vm66, %v63, 0.0
      %v74 = vadd.f32 %v72, %v73
      %75 = vadd.xlane.f32.xlu0 %v74
      %v76 = vpop.xlane.xlu0 %75
      %v77 = vld [vmem:[#allocation6] sm:$0xf]
      %v78 = vld [vmem:[%s2] sm:$0x1]
      %v80 = vlaneseq
      %v81 = vshrl.u32 %v80, 7
      %v82 = vsub.s32 0, %v81
      %v83 = vrot.slane %v78, %v82
      %v87 = vlaneseq
      %v88 = vand.u32 %v87, 127
      %v89 = vlaneseq
      %v90 = vshrl.u32 %v89, 7
      %v91 = vsub.s32 %v88, %v90
      %v92 = vrot.slane %v71, %v91
      %v93 = vlaneseq
      %v94 = vshrl.u32 %v93, 7
      %v95 = vsub.s32 %v88, %v94
      %v96 = vrot.slane %v76, %v95
      %vm97 = vcmask 1041409
      %v98 = vsel %vm97, %v96, %v92
      %vm99 = vcmask 31744
      %v100 = vsel %vm99, %v98, 0
      %v103 = vsel %vm66, %v77, 0
      %105 = vmatprep.subr.mxu0 0.0
      %106 = vmatpush1.msra.mxu0 %v103
      %107 = vmatprep.subr.mxu0 0.0
      %108 = vmatpush1.msra.mxu0 0.0
      %109 = vmatprep.subr.mxu0 0.0
      %110 = vmatpush1.msra.mxu0 0.0
      %111 = vmatprep.subr.mxu0 0.0
      %112 = vmatpush1.msra.mxu0 0.0
      %113 = vmatprep.subr.mxu0 0.0
      %114 = vmatpush1.msra.mxu0 0.0
      %115 = vmatprep.subr.mxu0 0.0
      %116 = vmatpush1.msra.mxu0 0.0
      %117 = vmatprep.subr.mxu0 0.0
      %118 = vmatpush1.msra.mxu0 0.0
      %119 = vmatprep.subr.mxu0 0.0
      %120 = vmatpush1.msra.mxu0 0.0
      %121 = vmatprep.subr.mxu0 0.0
      %122 = vmatpush1.msra.mxu0 0.0
      %123 = vmatprep.subr.mxu0 0.0
      %124 = vmatpush1.msra.mxu0 0.0
      %125 = vmatprep.subr.mxu0 0.0
      %126 = vmatpush1.msra.mxu0 0.0
      %127 = vmatprep.subr.mxu0 0.0
      %128 = vmatpush1.msra.mxu0 0.0
      %129 = vmatprep.subr.mxu0 0.0
      %130 = vmatpush1.msra.mxu0 0.0
      %131 = vmatprep.subr.mxu0 0.0
      %132 = vmatpush1.msra.mxu0 0.0
      %133 = vmatprep.subr.mxu0 0.0
      %134 = vmatpush1.msra.mxu0 0.0
      %135 = vmatprep.subr.mxu0 0.0
      %136 = vmatpush1.msra.mxu0 0.0
      %137 = vmatprep.subr.mxu0 0.0
      %138 = vmatpush1.msra.mxu0 0.0
      %139 = vmatprep.subr.mxu0 0.0
      %140 = vmatpush1.msra.mxu0 0.0
      %141 = vmatprep.subr.mxu0 0.0
      %142 = vmatpush1.msra.mxu0 0.0
      %143 = vmatprep.subr.mxu0 0.0
      %144 = vmatpush1.msra.mxu0 0.0
      %145 = vmatprep.subr.mxu0 0.0
      %146 = vmatpush1.msra.mxu0 0.0
      %147 = vmatprep.subr.mxu0 0.0
      %148 = vmatpush1.msra.mxu0 0.0
      %149 = vmatprep.subr.mxu0 0.0
      %150 = vmatpush1.msra.mxu0 0.0
      %151 = vmatprep.subr.mxu0 0.0
      %152 = vmatpush1.msra.mxu0 0.0
      %153 = vmatprep.subr.mxu0 0.0
      %154 = vmatpush1.msra.mxu0 0.0
      %155 = vmatprep.subr.mxu0 0.0
      %156 = vmatpush1.msra.mxu0 0.0
      %157 = vmatprep.subr.mxu0 0.0
      %158 = vmatpush1.msra.mxu0 0.0
      %159 = vmatprep.subr.mxu0 0.0
      %160 = vmatpush1.msra.mxu0 0.0
      %161 = vmatprep.subr.mxu0 0.0
      %162 = vmatpush1.msra.mxu0 0.0
      %163 = vmatprep.subr.mxu0 0.0
      %164 = vmatpush1.msra.mxu0 0.0
      %165 = vmatprep.subr.mxu0 0.0
      %166 = vmatpush1.msra.mxu0 0.0
      %167 = vmatprep.subr.mxu0 0.0
      %168 = vmatpush1.msra.mxu0 0.0
      %169 = vmatprep.mubr.f32.mxu0 0.0
      %170 = vmatmul.mubr.f32.gmra.mrb[0].mxu0 %v100
      %v171 = vpop.f32.mrb[0].mxu0
      %v172 = vadd.f32 %v83, %v171
      %v173 = vpop.f32.mrb[0].mxu0
      %174 = vdwg.mxu0
      %v175 = vmax.f32 %v172, 0.0
      %v178 = vunpack.c.l.s4 1966171168
      %v179 = vunpack.c.0.s8 %v178
      %v180 = vlaneseq
      %v181 = vshrl.u32 %v180, 7
      %v182 = vsub.s32 %v179, %v181
      %v183 = vrot.slane %v175, %v182
      %v184 = vcombine.high %v183, %v183
      %v186 = vunpack.c.l.s4 1966171168
      %v187 = vunpack.c.0.s8 %v186
      %v188 = vlaneseq
      %v189 = vshrl.u32 %v188, 7
      %v190 = vsub.s32 %v187, %v189
      %v191 = vrot.slane %v183, %v190
      %v193 = vunpack.c.l.s4 1966171168
      %v194 = vunpack.c.0.s8 %v193
      %v195 = vlaneseq
      %v196 = vshrl.u32 %v195, 7
      %v197 = vsub.s32 %v194, %v196
      %v198 = vrot.slane %v184, %v197
      %vm201 = vcmask 57344
      %202 = vst.msk [vmem:[#allocation8] sm:$0x1] %vm201, %v191
      %203 = vst.msk [vmem:[#allocation8 + $0x1] sm:$0x1] %vm201, %v198
    $region29: #{tpu_custom_call.1} parent=1 // pred_fallthru
      _
    // Predicated region
    $region30: #{tpu_custom_call.1} parent=1 // pred_check
      _
    $region31: #{tpu_custom_call.1} parent=1 // pred_check_branch
      %205 = sbr.rel (0) target = $region33
    $region32: #{tpu_custom_call.1} parent=1 // pred_region
      %s207 = ssub.s32 32, 32
      %208 = vsyncadd [#allocation5], %s207
      %s209 = sshll.u32 [#allocation8], 4
      %s210 = int_to_ptr.vmem [resolvable:$true] %s209
      %215 = dma.vmem_to_hbm [thread:$0]  %s210, 32, %s3, [#allocation5], 16, 16, 1
    $region33: #{tpu_custom_call.1} parent=1 // pred_fallthru
      _
    // Predicated region
    $region34: #{tpu_custom_call.1} parent=1 // pred_check
      _
    $region35: #{tpu_custom_call.1} parent=1 // pred_check_branch
      %217 = sbr.rel (0) target = $region37
    $region36: #{tpu_custom_call.1} parent=1 // pred_region
      %218 = dma.done [#allocation5], 32
    $region37: #{tpu_custom_call.1} parent=1 // pred_fallthru
      _
    %219 = vsyncpa [#allocation4], 1
    %220 = vsyncpa [#allocation7], 1
    %221 = vsyncpa [#allocation5], 1

</llo_original>
